<compile_context>
chip_gen: v6e
topology: v6e:2x2x1
jax: 0.10.0
libtpu: 0.0.40
codegen_flags: <defaults>
</compile_context>

<pallas_src>
import numpy as np
import jax
import jax.numpy as jnp
from jax import lax
from jax.experimental import pallas as pl
from jax.experimental.pallas import tpu as pltpu

_INV_SQRT2 = 0.7071067811865476  # python float -> weakly-typed f32

EGNN_PARAM_ORDER = ("w1s", "w1d", "w1r", "b1", "w2", "b2",
                    "wn1a", "wn1b", "bn1", "wn2", "bn2")
# Weights that only feed MXU matmuls -> pre-cast to bf16 in the wrapper.
_BF16_WEIGHTS = {"w1s", "w1d", "w2", "wn1a", "wn1b", "wn2"}


# ----------------------------------------------------------------------------- shared math
# (used identically by the kernels and by the pure-JAX reference, so the correctness check
#  verifies the Pallas restructuring with a matched bf16-matmul / f32-accumulate policy)

def _mm(a, b):
    """MXU matmul: bf16 operands, f32 accumulation."""
    return jnp.dot(a.astype(jnp.bfloat16), b.astype(jnp.bfloat16),
                   preferred_element_type=jnp.float32)


def _silu(v):
    return v * jax.nn.sigmoid(v)


def _gelu_exact(v):
    # torch.nn.GELU() default (approximate='none')
    return 0.5 * v * (1.0 + lax.erf(v * _INV_SQRT2))


def _layer_norm(v, gamma, beta, eps=1e-5):
    mu = jnp.mean(v, axis=-1, keepdims=True)
    var = jnp.mean((v - mu) * (v - mu), axis=-1, keepdims=True)
    return (v - mu) * lax.rsqrt(var + eps) * gamma + beta


# ----------------------------------------------------------------------------- kernels

def _encode_kernel(feat_ref, xyz_ref, xyz_t_ref,
                   we1_ref, be1_ref, g1_ref, bt1_ref,
                   we2_ref, be2_ref, g2_ref, bt2_ref,
                   h_out_ref, radial_out_ref):
    # initial_node_embedding: Linear -> LayerNorm -> GELU -> Linear -> LayerNorm -> GELU
    y = _mm(feat_ref[...], we1_ref[...]) + be1_ref[...]
    y = _gelu_exact(_layer_norm(y, g1_ref[...], bt1_ref[...]))
    y = _mm(y, we2_ref[...]) + be2_ref[...]
    h_out_ref[...] = _gelu_exact(_layer_norm(y, g2_ref[...], bt2_ref[...]))

    # Pairwise squared distances radial[dst, src] = ||xyz[src] - xyz[dst]||^2 ; computed ONCE
    # (layer-invariant because GraphConv reuses the original xyz every layer).
    # Built from per-coordinate 2-D outer differences -> no in-kernel transpose, no 3-D arrays.
    x = xyz_ref[...]        # [N, 3]
    xt = xyz_t_ref[...]     # [3, N]  (transposed in the wrapper, free)
    acc = None
    for k in range(3):
        dk = x[:, k:k + 1] - xt[k:k + 1, :]          # [N, 1] - [1, N] -> [N, N]
        acc = dk * dk if acc is None else acc + dk * dk
    radial_out_ref[...] = acc


def _egnn_layer_kernel(h_src_ref, h_dst_ref, radial_ref, adj_ref,
                       w1s_ref, w1d_ref, w1r_ref, b1_ref, w2_ref, b2_ref,
                       wn1a_ref, wn1b_ref, bn1_ref, wn2_ref, bn2_ref,
                       h_out_ref):
    DB, N = adj_ref.shape                     # dst-block size, number of source nodes
    H = w2_ref.shape[1]

    h_src = h_src_ref[...]                    # [N,  C]  all source nodes (full)
    h_dst = h_dst_ref[...]                    # [DB, C]  this block's destination nodes
    radial = radial_ref[...]                  # [DB, N]
    adj = adj_ref[...]                        # [DB, N]  incoming-edge mask

    # edge_mlp first Linear on cat([h_src, h_dst, radial]) split into three pieces.
    # Destination-invariant source term computed ONCE per block (not per dst node).
    A = _mm(h_src, w1s_ref[...])              # [N,  H]
    B = _mm(h_dst, w1d_ref[...])              # [DB, H]

    # All-pairs pre-activation via vectorized broadcasts (dst-major): pre[d, s, :] is the
    # message pre-activation for edge src s -> dst d.  No per-source Python loop.
    pre = (B[:, None, :] + A[None, :, :]
           + radial[:, :, None] * w1r_ref[...] + b1_ref[...])          # [DB, N, H]

    # edge_mlp second Linear runs as ONE big MXU matmul over the flattened slab.
    slab = _silu(pre).reshape(DB * N, H)                               # [DB*N, H]
    msg = _silu(_mm(slab, w2_ref[...]) + b2_ref[...])                  # [DB*N, H]

    # Sum-aggregate incoming edges with the adjacency mask: single fused multiply + reduce.
    h_neigh = jnp.sum(adj[:, :, None] * msg.reshape(DB, N, H), axis=1)  # [DB, H]

    # node_mlp on cat([h_dst, h_neigh]) (first Linear split), dense [DB, C] store.
    n1 = _silu(_mm(h_dst, wn1a_ref[...]) + _mm(h_neigh, wn1b_ref[...]) + bn1_ref[...])
    h_out_ref[...] = _mm(n1, wn2_ref[...]) + bn2_ref[...]


# ----------------------------------------------------------------------------- wrappers

def _full_spec(shape):
    nd = len(shape)
    return pl.BlockSpec(shape, lambda i, _nd=nd: (0,) * _nd)


def encode(node_feat, xyz, p):
    """Fused initial embedding MLP + pairwise radial, single pallas_call."""
    N, _ = node_feat.shape
    C = p["we1"].shape[1]
    args = (node_feat, xyz, xyz.T,
            p["we1"].astype(jnp.bfloat16), p["be1"], p["g1"], p["bt1"],
            p["we2"].astype(jnp.bfloat16), p["be2"], p["g2"], p["bt2"])
    return pl.pallas_call(
        _encode_kernel,
        out_shape=(jax.ShapeDtypeStruct((N, C), jnp.float32),
                   jax.ShapeDtypeStruct((N, N), jnp.float32)),
        grid=(1,),
        in_specs=[_full_spec(a.shape) for a in args],
        out_specs=(_full_spec((N, C)), _full_spec((N, N))),
    )(*args)


def egnn_layer(h, radial, adj, params, *, dst_block=8):
    """One EGNNConv layer.  Grid = destination-node blocks, marked 'parallel'
    (disjoint output blocks -> safe to split across v7x's two TensorCores)."""
    N, C = h.shape
    # dst block must be a multiple of 8 (sublane tile) dividing N, else fall back to one block
    DB = dst_block if (dst_block % 8 == 0 and N % dst_block == 0) else N
    grid = (N // DB,)
    w_args = tuple(params[k].astype(jnp.bfloat16) if k in _BF16_WEIGHTS else params[k]
                   for k in EGNN_PARAM_ORDER)

    in_specs = ([pl.BlockSpec((N, C), lambda b: (0, 0)),     # h as sources (full, fetched once)
                 pl.BlockSpec((DB, C), lambda b: (b, 0)),    # h dst block
                 pl.BlockSpec((DB, N), lambda b: (b, 0)),    # radial block
                 pl.BlockSpec((DB, N), lambda b: (b, 0))]    # adjacency block
                + [_full_spec(w.shape) for w in w_args])

    return pl.pallas_call(
        _egnn_layer_kernel,
        out_shape=jax.ShapeDtypeStruct((N, C), jnp.float32),
        grid=grid,
        in_specs=in_specs,
        out_specs=pl.BlockSpec((DB, C), lambda b: (b, 0)),
        compiler_params=pltpu.CompilerParams(dimension_semantics=("parallel",)),
    )(h, h, radial, adj, *w_args)


def residue_atom_encoding_forward(node_feat, xyz, adj, edge_feat, params,
                                  *, do_dropout=False, dst_block=8):
    # TODO(synk): do_dropout=True (nn.Dropout p=0.3) and the embedding Dropout layers are
    # eval-mode identities here; stochastic dropout (pltpu.prng_*) is not implemented.
    h, radial = encode(node_feat, xyz, params["embed"])
    for lp in params["layers"]:
        h = egnn_layer(h, radial, adj, lp, dst_block=dst_block)
    return h, edge_feat


# ----------------------------------------------------------------------------- params

def _linear_init(key, fan_in, fan_out):
    kw, kb = jax.random.split(key)
    bound = 1.0 / float(np.sqrt(fan_in))
    w = jax.random.uniform(kw, (fan_in, fan_out), jnp.float32, -bound, bound)
    b = jax.random.uniform(kb, (1, fan_out), jnp.float32, -bound, bound)
    return w, b


def init_egnn_layer(key, C, H):
    k1, k2, k3, k4 = jax.random.split(key, 4)
    w1, b1 = _linear_init(k1, 2 * C + 1, H)      # edge_mlp[0] on cat([h_src, h_dst, radial])
    w2, b2 = _linear_init(k2, H, H)              # edge_mlp[2]
    wn1, bn1 = _linear_init(k3, C + H, H)        # node_mlp[0] on cat([h, h_neigh])
    wn2, bn2 = _linear_init(k4, H, C)            # node_mlp[2]
    # coord_mlp weights intentionally omitted: the coordinate update is discarded by GraphConv.
    return dict(w1s=w1[:C], w1d=w1[C:2 * C], w1r=w1[2 * C:], b1=b1,
                w2=w2, b2=b2,
                wn1a=wn1[:C], wn1b=wn1[C:], bn1=bn1, wn2=wn2, bn2=bn2)


def init_params(key, n_input_feats, channels, num_layers):
    k1, k2, kl = jax.random.split(key, 3)
    we1, be1 = _linear_init(k1, n_input_feats, channels)
    we2, be2 = _linear_init(k2, channels, channels)
    embed = dict(we1=we1, be1=be1,
                 g1=jnp.ones((1, channels), jnp.float32),
                 bt1=jnp.zeros((1, channels), jnp.float32),
                 we2=we2, be2=be2,
                 g2=jnp.ones((1, channels), jnp.float32),
                 bt2=jnp.zeros((1, channels), jnp.float32))
    layers = [init_egnn_layer(k, channels, channels)
              for k in jax.random.split(kl, num_layers)]
    return dict(embed=embed, layers=layers)


# ----------------------------------------------------------------------------- pure-JAX reference

def _encode_ref(feat, xyz, p):
    y = _mm(feat, p["we1"]) + p["be1"]
    y = _gelu_exact(_layer_norm(y, p["g1"], p["bt1"]))
    y = _mm(y, p["we2"]) + p["be2"]
    h = _gelu_exact(_layer_norm(y, p["g2"], p["bt2"]))
    diff = xyz[:, None, :] - xyz[None, :, :]
    radial = jnp.sum(diff * diff, axis=-1)
    return h, radial


def _egnn_layer_ref(h, radial, adj, p):
    A = _mm(h, p["w1s"])                                             # src term
    B = _mm(h, p["w1d"])                                             # dst term
    pre1 = A[None, :, :] + B[:, None, :] + radial[:, :, None] * p["w1r"] + p["b1"]
    msg = _silu(jnp.einsum("dsh,hk->dsk",
                           _silu(pre1).astype(jnp.bfloat16),
                           p["w2"].astype(jnp.bfloat16),
                           preferred_element_type=jnp.float32) + p["b2"])
    h_neigh = jnp.sum(adj[:, :, None] * msg, axis=1)                 # sum aggregation
    n1 = _silu(_mm(h, p["wn1a"]) + _mm(h_neigh, p["wn1b"]) + p["bn1"])
    return _mm(n1, p["wn2"]) + p["bn2"]


# ----------------------------------------------------------------------------- main

if __name__ == "__main__":
    N, F, C, NUM_LAYERS, E_FEAT = 16, 24, 32, 2, 8

    key = jax.random.PRNGKey(0)
    k_feat, k_xyz, k_edge, k_par = jax.random.split(key, 4)

    node_feat = jax.random.normal(k_feat, (N, F), jnp.float32)       # G.ndata['attr']
    xyz = jax.random.normal(k_xyz, (N, 3), jnp.float32)              # G.ndata['xyz']
    edge_feat = jax.random.normal(k_edge, (N * (N - 1), E_FEAT), jnp.float32)  # G.edata['attr']
    # fully connected directed graph without self loops (dense stand-in for the dgl graph)
    adj = jnp.ones((N, N), jnp.float32) - jnp.eye(N, dtype=jnp.float32)

    params = init_params(k_par, F, C, NUM_LAYERS)

    out_h, out_e = residue_atom_encoding_forward(node_feat, xyz, adj, edge_feat, params,
                                                 do_dropout=False, dst_block=8)
    out_h = jax.block_until_ready(out_h)

    # reference: same dense-graph math in plain JAX (same bf16-matmul / f32-accumulate policy)
    h_ref, radial_ref = _encode_ref(node_feat, xyz, params["embed"])
    for lp in params["layers"]:
        h_ref = _egnn_layer_ref(h_ref, radial_ref, adj, lp)

    np.testing.assert_allclose(np.asarray(out_h), np.asarray(h_ref), rtol=1e-2, atol=1e-3)
    assert out_e is edge_feat  # edge features are a passthrough, as in the PyTorch forward
    print("KERNEL_OK")
</pallas_src>

<mosaic_0001>
module attributes {stable_mosaic.version = 11 : i64} {
  func.func @_encode_kernel(%arg0: i32, %arg1: memref<16x24xf32, #tpu.memory_space<vmem>>, %arg2: memref<16x3xf32, #tpu.memory_space<vmem>>, %arg3: memref<3x16xf32, #tpu.memory_space<vmem>>, %arg4: memref<24x32xbf16, #tpu.memory_space<vmem>>, %arg5: memref<1x32xf32, #tpu.memory_space<vmem>>, %arg6: memref<1x32xf32, #tpu.memory_space<vmem>>, %arg7: memref<1x32xf32, #tpu.memory_space<vmem>>, %arg8: memref<32x32xbf16, #tpu.memory_space<vmem>>, %arg9: memref<1x32xf32, #tpu.memory_space<vmem>>, %arg10: memref<1x32xf32, #tpu.memory_space<vmem>>, %arg11: memref<1x32xf32, #tpu.memory_space<vmem>>, %arg12: memref<16x32xf32, #tpu.memory_space<vmem>>, %arg13: memref<16x16xf32, #tpu.memory_space<vmem>>) attributes {dimension_semantics = [#tpu.dimension_semantics<arbitrary>], iteration_bounds = array<i64: 1>, scalar_prefetch = 0 : i64, scratch_operands = 0 : i64, tpu.core_type = #tpu.core_type<tc>, window_params = [{pipeline_mode = #tpu.pipeline_mode<synchronous>, transform_indices = @transform_0, window_bounds = array<i64: 16, 24>}, {pipeline_mode = #tpu.pipeline_mode<synchronous>, transform_indices = @transform_1, window_bounds = array<i64: 16, 3>}, {pipeline_mode = #tpu.pipeline_mode<synchronous>, transform_indices = @transform_2, window_bounds = array<i64: 3, 16>}, {pipeline_mode = #tpu.pipeline_mode<synchronous>, transform_indices = @transform_3, window_bounds = array<i64: 24, 32>}, {pipeline_mode = #tpu.pipeline_mode<synchronous>, transform_indices = @transform_4, window_bounds = array<i64: 1, 32>}, {pipeline_mode = #tpu.pipeline_mode<synchronous>, transform_indices = @transform_5, window_bounds = array<i64: 1, 32>}, {pipeline_mode = #tpu.pipeline_mode<synchronous>, transform_indices = @transform_6, window_bounds = array<i64: 1, 32>}, {pipeline_mode = #tpu.pipeline_mode<synchronous>, transform_indices = @transform_7, window_bounds = array<i64: 32, 32>}, {pipeline_mode = #tpu.pipeline_mode<synchronous>, transform_indices = @transform_8, window_bounds = array<i64: 1, 32>}, {pipeline_mode = #tpu.pipeline_mode<synchronous>, transform_indices = @transform_9, window_bounds = array<i64: 1, 32>}, {pipeline_mode = #tpu.pipeline_mode<synchronous>, transform_indices = @transform_10, window_bounds = array<i64: 1, 32>}, {pipeline_mode = #tpu.pipeline_mode<synchronous>, transform_indices = @transform_11, window_bounds = array<i64: 16, 32>}, {pipeline_mode = #tpu.pipeline_mode<synchronous>, transform_indices = @transform_12, window_bounds = array<i64: 16, 16>}]} {
    %c0 = arith.constant 0 : index
    %c0_0 = arith.constant 0 : index
    %0 = vector.load %arg1[%c0, %c0_0] : memref<16x24xf32, #tpu.memory_space<vmem>>, vector<16x24xf32>
    %c0_1 = arith.constant 0 : index
    %c0_2 = arith.constant 0 : index
    %1 = vector.load %arg4[%c0_1, %c0_2] : memref<24x32xbf16, #tpu.memory_space<vmem>>, vector<24x32xbf16>
    %2 = arith.truncf %0 : vector<16x24xf32> to vector<16x24xbf16>
    %cst = arith.constant dense<0.000000e+00> : vector<16x32xf32>
    %3 = tpu.matmul %2, %1, %cst {dimension_numbers = #tpu.dot_dimension_numbers<[1], [0], [0], [1], [0, 0, 1, 1], [], []>} : vector<16x24xbf16>, vector<24x32xbf16>, vector<16x32xf32> -> vector<16x32xf32>
    %c0_3 = arith.constant 0 : index
    %c0_4 = arith.constant 0 : index
    %4 = vector.load %arg5[%c0_3, %c0_4] : memref<1x32xf32, #tpu.memory_space<vmem>>, vector<1x32xf32>
    %5 = vector.broadcast %4 : vector<1x32xf32> to vector<16x32xf32>
    %6 = arith.addf %3, %5 : vector<16x32xf32>
    %c0_5 = arith.constant 0 : index
    %c0_6 = arith.constant 0 : index
    %7 = vector.load %arg6[%c0_5, %c0_6] : memref<1x32xf32, #tpu.memory_space<vmem>>, vector<1x32xf32>
    %c0_7 = arith.constant 0 : index
    %c0_8 = arith.constant 0 : index
    %8 = vector.load %arg7[%c0_7, %c0_8] : memref<1x32xf32, #tpu.memory_space<vmem>>, vector<1x32xf32>
    %cst_9 = arith.constant dense<0.000000e+00> : vector<16xf32>
    %9 = vector.multi_reduction <add>, %6, %cst_9 [1] : vector<16x32xf32> to vector<16xf32>
    %10 = vector.shape_cast %9 : vector<16xf32> to vector<16x1xf32>
    %cst_10 = arith.constant 3.200000e+01 : f32
    %11 = vector.broadcast %cst_10 : f32 to vector<16x1xf32>
    %12 = arith.divf %10, %11 : vector<16x1xf32>
    %13 = vector.broadcast %12 : vector<16x1xf32> to vector<16x32xf32>
    %14 = arith.subf %6, %13 : vector<16x32xf32>
    %15 = vector.broadcast %12 : vector<16x1xf32> to vector<16x32xf32>
    %16 = arith.subf %6, %15 : vector<16x32xf32>
    %17 = arith.mulf %14, %16 : vector<16x32xf32>
    %cst_11 = arith.constant dense<0.000000e+00> : vector<16xf32>
    %18 = vector.multi_reduction <add>, %17, %cst_11 [1] : vector<16x32xf32> to vector<16xf32>
    %19 = vector.shape_cast %18 : vector<16xf32> to vector<16x1xf32>
    %cst_12 = arith.constant 3.200000e+01 : f32
    %20 = vector.broadcast %cst_12 : f32 to vector<16x1xf32>
    %21 = arith.divf %19, %20 : vector<16x1xf32>
    %22 = vector.broadcast %12 : vector<16x1xf32> to vector<16x32xf32>
    %23 = arith.subf %6, %22 : vector<16x32xf32>
    %cst_13 = arith.constant 9.99999974E-6 : f32
    %24 = vector.broadcast %cst_13 : f32 to vector<16x1xf32>
    %25 = arith.addf %21, %24 : vector<16x1xf32>
    %26 = math.rsqrt %25 : vector<16x1xf32>
    %27 = vector.broadcast %26 : vector<16x1xf32> to vector<16x32xf32>
    %28 = arith.mulf %23, %27 : vector<16x32xf32>
    %29 = vector.broadcast %7 : vector<1x32xf32> to vector<16x32xf32>
    %30 = arith.mulf %28, %29 : vector<16x32xf32>
    %31 = vector.broadcast %8 : vector<1x32xf32> to vector<16x32xf32>
    %32 = arith.addf %30, %31 : vector<16x32xf32>
    %cst_14 = arith.constant 5.000000e-01 : f32
    %33 = vector.broadcast %cst_14 : f32 to vector<16x32xf32>
    %34 = arith.mulf %33, %32 : vector<16x32xf32>
    %cst_15 = arith.constant 0.707106769 : f32
    %35 = vector.broadcast %cst_15 : f32 to vector<16x32xf32>
    %36 = arith.mulf %32, %35 : vector<16x32xf32>
    %37 = math.erf %36 : vector<16x32xf32>
    %cst_16 = arith.constant 1.000000e+00 : f32
    %38 = vector.broadcast %cst_16 : f32 to vector<16x32xf32>
    %39 = arith.addf %38, %37 : vector<16x32xf32>
    %40 = arith.mulf %34, %39 : vector<16x32xf32>
    %c0_17 = arith.constant 0 : index
    %c0_18 = arith.constant 0 : index
    %41 = vector.load %arg8[%c0_17, %c0_18] : memref<32x32xbf16, #tpu.memory_space<vmem>>, vector<32x32xbf16>
    %42 = arith.truncf %40 : vector<16x32xf32> to vector<16x32xbf16>
    %cst_19 = arith.constant dense<0.000000e+00> : vector<16x32xf32>
    %43 = tpu.matmul %42, %41, %cst_19 {dimension_numbers = #tpu.dot_dimension_numbers<[1], [0], [0], [1], [0, 0, 1, 1], [], []>} : vector<16x32xbf16>, vector<32x32xbf16>, vector<16x32xf32> -> vector<16x32xf32>
    %c0_20 = arith.constant 0 : index
    %c0_21 = arith.constant 0 : index
    %44 = vector.load %arg9[%c0_20, %c0_21] : memref<1x32xf32, #tpu.memory_space<vmem>>, vector<1x32xf32>
    %45 = vector.broadcast %44 : vector<1x32xf32> to vector<16x32xf32>
    %46 = arith.addf %43, %45 : vector<16x32xf32>
    %c0_22 = arith.constant 0 : index
    %c0_23 = arith.constant 0 : index
    %47 = vector.load %arg10[%c0_22, %c0_23] : memref<1x32xf32, #tpu.memory_space<vmem>>, vector<1x32xf32>
    %c0_24 = arith.constant 0 : index
    %c0_25 = arith.constant 0 : index
    %48 = vector.load %arg11[%c0_24, %c0_25] : memref<1x32xf32, #tpu.memory_space<vmem>>, vector<1x32xf32>
    %cst_26 = arith.constant dense<0.000000e+00> : vector<16xf32>
    %49 = vector.multi_reduction <add>, %46, %cst_26 [1] : vector<16x32xf32> to vector<16xf32>
    %50 = vector.shape_cast %49 : vector<16xf32> to vector<16x1xf32>
    %cst_27 = arith.constant 3.200000e+01 : f32
    %51 = vector.broadcast %cst_27 : f32 to vector<16x1xf32>
    %52 = arith.divf %50, %51 : vector<16x1xf32>
    %53 = vector.broadcast %52 : vector<16x1xf32> to vector<16x32xf32>
    %54 = arith.subf %46, %53 : vector<16x32xf32>
    %55 = vector.broadcast %52 : vector<16x1xf32> to vector<16x32xf32>
    %56 = arith.subf %46, %55 : vector<16x32xf32>
    %57 = arith.mulf %54, %56 : vector<16x32xf32>
    %cst_28 = arith.constant dense<0.000000e+00> : vector<16xf32>
    %58 = vector.multi_reduction <add>, %57, %cst_28 [1] : vector<16x32xf32> to vector<16xf32>
    %59 = vector.shape_cast %58 : vector<16xf32> to vector<16x1xf32>
    %cst_29 = arith.constant 3.200000e+01 : f32
    %60 = vector.broadcast %cst_29 : f32 to vector<16x1xf32>
    %61 = arith.divf %59, %60 : vector<16x1xf32>
    %62 = vector.broadcast %52 : vector<16x1xf32> to vector<16x32xf32>
    %63 = arith.subf %46, %62 : vector<16x32xf32>
    %cst_30 = arith.constant 9.99999974E-6 : f32
    %64 = vector.broadcast %cst_30 : f32 to vector<16x1xf32>
    %65 = arith.addf %61, %64 : vector<16x1xf32>
    %66 = math.rsqrt %65 : vector<16x1xf32>
    %67 = vector.broadcast %66 : vector<16x1xf32> to vector<16x32xf32>
    %68 = arith.mulf %63, %67 : vector<16x32xf32>
    %69 = vector.broadcast %47 : vector<1x32xf32> to vector<16x32xf32>
    %70 = arith.mulf %68, %69 : vector<16x32xf32>
    %71 = vector.broadcast %48 : vector<1x32xf32> to vector<16x32xf32>
    %72 = arith.addf %70, %71 : vector<16x32xf32>
    %cst_31 = arith.constant 5.000000e-01 : f32
    %73 = vector.broadcast %cst_31 : f32 to vector<16x32xf32>
    %74 = arith.mulf %73, %72 : vector<16x32xf32>
    %cst_32 = arith.constant 0.707106769 : f32
    %75 = vector.broadcast %cst_32 : f32 to vector<16x32xf32>
    %76 = arith.mulf %72, %75 : vector<16x32xf32>
    %77 = math.erf %76 : vector<16x32xf32>
    %cst_33 = arith.constant 1.000000e+00 : f32
    %78 = vector.broadcast %cst_33 : f32 to vector<16x32xf32>
    %79 = arith.addf %78, %77 : vector<16x32xf32>
    %80 = arith.mulf %74, %79 : vector<16x32xf32>
    %c0_34 = arith.constant 0 : index
    %c0_35 = arith.constant 0 : index
    %81 = vector.load %arg12[%c0_34, %c0_35] : memref<16x32xf32, #tpu.memory_space<vmem>>, vector<16x32xf32>
    tpu.vector_store %arg12[%c0_34, %c0_35], %80 {strides = array<i32>} : memref<16x32xf32, #tpu.memory_space<vmem>>, vector<16x32xf32>,
    %c0_36 = arith.constant 0 : index
    %c0_37 = arith.constant 0 : index
    %82 = vector.load %arg2[%c0_36, %c0_37] : memref<16x3xf32, #tpu.memory_space<vmem>>, vector<16x3xf32>
    %c0_38 = arith.constant 0 : index
    %c0_39 = arith.constant 0 : index
    %83 = vector.load %arg3[%c0_38, %c0_39] : memref<3x16xf32, #tpu.memory_space<vmem>>, vector<3x16xf32>
    %84 = vector.extract_strided_slice %82 {offsets = [0, 0], sizes = [16, 1], strides = [1, 1]} : vector<16x3xf32> to vector<16x1xf32>
    %85 = vector.extract_strided_slice %83 {offsets = [0, 0], sizes = [1, 16], strides = [1, 1]} : vector<3x16xf32> to vector<1x16xf32>
    %86 = vector.broadcast %84 : vector<16x1xf32> to vector<16x16xf32>
    %87 = vector.broadcast %85 : vector<1x16xf32> to vector<16x16xf32>
    %88 = arith.subf %86, %87 : vector<16x16xf32>
    %89 = arith.mulf %88, %88 : vector<16x16xf32>
    %90 = vector.extract_strided_slice %82 {offsets = [0, 1], sizes = [16, 1], strides = [1, 1]} : vector<16x3xf32> to vector<16x1xf32>
    %91 = vector.extract_strided_slice %83 {offsets = [1, 0], sizes = [1, 16], strides = [1, 1]} : vector<3x16xf32> to vector<1x16xf32>
    %92 = vector.broadcast %90 : vector<16x1xf32> to vector<16x16xf32>
    %93 = vector.broadcast %91 : vector<1x16xf32> to vector<16x16xf32>
    %94 = arith.subf %92, %93 : vector<16x16xf32>
    %95 = arith.mulf %94, %94 : vector<16x16xf32>
    %96 = arith.addf %89, %95 : vector<16x16xf32>
    %97 = vector.extract_strided_slice %82 {offsets = [0, 2], sizes = [16, 1], strides = [1, 1]} : vector<16x3xf32> to vector<16x1xf32>
    %98 = vector.extract_strided_slice %83 {offsets = [2, 0], sizes = [1, 16], strides = [1, 1]} : vector<3x16xf32> to vector<1x16xf32>
    %99 = vector.broadcast %97 : vector<16x1xf32> to vector<16x16xf32>
    %100 = vector.broadcast %98 : vector<1x16xf32> to vector<16x16xf32>
    %101 = arith.subf %99, %100 : vector<16x16xf32>
    %102 = arith.mulf %101, %101 : vector<16x16xf32>
    %103 = arith.addf %96, %102 : vector<16x16xf32>
    %c0_40 = arith.constant 0 : index
    %c0_41 = arith.constant 0 : index
    %104 = vector.load %arg13[%c0_40, %c0_41] : memref<16x16xf32, #tpu.memory_space<vmem>>, vector<16x16xf32>
    tpu.vector_store %arg13[%c0_40, %c0_41], %103 {strides = array<i32>} : memref<16x16xf32, #tpu.memory_space<vmem>>, vector<16x16xf32>,
    return
  }
  func.func @transform_0(%arg0: i32) -> (i32, i32) {
    %c0_i32 = arith.constant 0 : i32
    %c0_i32_0 = arith.constant 0 : i32
    %c0_i32_1 = arith.constant 0 : i32
    return %c0_i32, %c0_i32_0 : i32, i32
  }
  func.func @transform_1(%arg0: i32) -> (i32, i32) {
    %c0_i32 = arith.constant 0 : i32
    %c0_i32_0 = arith.constant 0 : i32
    %c0_i32_1 = arith.constant 0 : i32
    return %c0_i32, %c0_i32_0 : i32, i32
  }
  func.func @transform_2(%arg0: i32) -> (i32, i32) {
    %c0_i32 = arith.constant 0 : i32
    %c0_i32_0 = arith.constant 0 : i32
    %c0_i32_1 = arith.constant 0 : i32
    return %c0_i32, %c0_i32_0 : i32, i32
  }
  func.func @transform_3(%arg0: i32) -> (i32, i32) {
    %c0_i32 = arith.constant 0 : i32
    %c0_i32_0 = arith.constant 0 : i32
    %c0_i32_1 = arith.constant 0 : i32
    return %c0_i32, %c0_i32_0 : i32, i32
  }
  func.func @transform_4(%arg0: i32) -> (i32, i32) {
    %c0_i32 = arith.constant 0 : i32
    %c0_i32_0 = arith.constant 0 : i32
    %c0_i32_1 = arith.constant 0 : i32
    return %c0_i32, %c0_i32_0 : i32, i32
  }
  func.func @transform_5(%arg0: i32) -> (i32, i32) {
    %c0_i32 = arith.constant 0 : i32
    %c0_i32_0 = arith.constant 0 : i32
    %c0_i32_1 = arith.constant 0 : i32
    return %c0_i32, %c0_i32_0 : i32, i32
  }
  func.func @transform_6(%arg0: i32) -> (i32, i32) {
    %c0_i32 = arith.constant 0 : i32
    %c0_i32_0 = arith.constant 0 : i32
    %c0_i32_1 = arith.constant 0 : i32
    return %c0_i32, %c0_i32_0 : i32, i32
  }
  func.func @transform_7(%arg0: i32) -> (i32, i32) {
    %c0_i32 = arith.constant 0 : i32
    %c0_i32_0 = arith.constant 0 : i32
    %c0_i32_1 = arith.constant 0 : i32
    return %c0_i32, %c0_i32_0 : i32, i32
  }
  func.func @transform_8(%arg0: i32) -> (i32, i32) {
    %c0_i32 = arith.constant 0 : i32
    %c0_i32_0 = arith.constant 0 : i32
    %c0_i32_1 = arith.constant 0 : i32
    return %c0_i32, %c0_i32_0 : i32, i32
  }
  func.func @transform_9(%arg0: i32) -> (i32, i32) {
    %c0_i32 = arith.constant 0 : i32
    %c0_i32_0 = arith.constant 0 : i32
    %c0_i32_1 = arith.constant 0 : i32
    return %c0_i32, %c0_i32_0 : i32, i32
  }
  func.func @transform_10(%arg0: i32) -> (i32, i32) {
    %c0_i32 = arith.constant 0 : i32
    %c0_i32_0 = arith.constant 0 : i32
    %c0_i32_1 = arith.constant 0 : i32
    return %c0_i32, %c0_i32_0 : i32, i32
  }
  func.func @transform_11(%arg0: i32) -> (i32, i32) {
    %c0_i32 = arith.constant 0 : i32
    %c0_i32_0 = arith.constant 0 : i32
    %c0_i32_1 = arith.constant 0 : i32
    return %c0_i32, %c0_i32_0 : i32, i32
  }
  func.func @transform_12(%arg0: i32) -> (i32, i32) {
    %c0_i32 = arith.constant 0 : i32
    %c0_i32_0 = arith.constant 0 : i32
    %c0_i32_1 = arith.constant 0 : i32
    return %c0_i32, %c0_i32_0 : i32, i32
  }
}

</mosaic_0001>

<llo_original>
// kernel: tpu_custom_call.1
$region0: #{tpu_custom_call.1}
  #allocation0 [shape = 'u32[]', space=smem, size = 0x4, offset = 0x4, fixed_abs, tag = 'smem constant byte address 0x4 - core index']
  #allocation1 [shape = 'u32[144,128]{1,0:T(1,128)}', space=vmem, size = 0x12000, scoped, tag = 'internal scratch']
  %s0 = inlined_call_operand.vmem [shape: f32[16,24], index: 0, kind: input, shape index: {}]
  %s1 = inlined_call_operand.vmem [shape: f32[16,3], index: 1, kind: input, shape index: {}]
  %s2 = inlined_call_operand.hbm [shape: f32[3,16], index: 2, kind: input, shape index: {}]
  %s3 = inlined_call_operand.hbm [shape: bf16[24,32], index: 3, kind: input, shape index: {}]
  %s4 = inlined_call_operand.hbm [shape: f32[1,32], index: 4, kind: input, shape index: {}]
  %s5 = inlined_call_operand.hbm [shape: f32[1,32], index: 5, kind: input, shape index: {}]
  %s6 = inlined_call_operand.hbm [shape: f32[1,32], index: 6, kind: input, shape index: {}]
  %s7 = inlined_call_operand.vmem [shape: bf16[32,32], index: 7, kind: input, shape index: {}]
  %s8 = inlined_call_operand.vmem [shape: f32[1,32], index: 8, kind: input, shape index: {}]
  %s9 = inlined_call_operand.vmem [shape: f32[1,32], index: 9, kind: input, shape index: {}]
  %s10 = inlined_call_operand.vmem [shape: f32[1,32], index: 10, kind: input, shape index: {}]
  %s11 = inlined_call_operand.hbm [shape: f32[16,32], index: 11, kind: output, shape index: {0}]
  %s12 = inlined_call_operand.hbm [shape: f32[16,16], index: 12, kind: output, shape index: {1}]
  %13 = xla_tuple %s11, %s12
  %s14 = sld [smem:[#allocation0]]
  $region82: #{tpu_custom_call.1} parent=0
    _
  %s16 = ssub.s32 1, %s14
  %s17 = scalar_select 0, %s16, %s14
  $region1: #{tpu_custom_call.1} parent=0
    #allocation2 [shape = 'u8[2048]{0}', space=vmem, size = 0x800, scoped, tag = 'input window, operand 2, single buffered']
    #allocation3 [shape = 's32[1]{0}', space=sflag, size = 0x4, scoped, tag = 'scoped memory for tpu_custom_call.1']
    #allocation4 [shape = 's32[1]{0}', space=sflag, size = 0x4, scoped, tag = 'scoped memory for tpu_custom_call.1']
    #allocation5 [shape = 'u8[6144]{0}', space=vmem, size = 0x1800, scoped, tag = 'input window, operand 3, single buffered']
    #allocation6 [shape = 's32[1]{0}', space=sflag, size = 0x4, scoped, tag = 'scoped memory for tpu_custom_call.1']
    #allocation7 [shape = 'u8[512]{0}', space=vmem, size = 0x400, scoped, tag = 'input window, operand 4, single buffered']
    #allocation8 [shape = 'u8[512]{0}', space=vmem, size = 0x400, scoped, tag = 'input window, operand 5, single buffered']
    #allocation9 [shape = 's32[1]{0}', space=sflag, size = 0x4, scoped, tag = 'scoped memory for tpu_custom_call.1']
    #allocation10 [shape = 'u8[512]{0}', space=vmem, size = 0x400, scoped, tag = 'input window, operand 6, single buffered']
    #allocation11 [shape = 'u8[8192]{0}', space=vmem, size = 0x2000, scoped, tag = 'output window, operand 0, single buffered']
    #allocation12 [shape = 'u8[8192]{0}', space=vmem, size = 0x2000, scoped, tag = 'output window, operand 1, single buffered']
    #allocation13 [shape = 's32[1]{0}', space=sflag, size = 0x4, scoped, tag = 'scoped memory for tpu_custom_call.1']
    %18 = vsyncpa [#allocation3], 0
    %19 = vsyncpa [#allocation6], 0
    %20 = vsyncpa [#allocation9], 0
    %21 = vsyncpa [#allocation4], 0
    %22 = vsyncpa [#allocation13], 0
    // Predicated region
    $region2: #{tpu_custom_call.1} parent=1 // pred_check
      _
    $region3: #{tpu_custom_call.1} parent=1 // pred_check_branch
      %24 = sbr.rel (0) target = $region5
    $region4: #{tpu_custom_call.1} parent=1 // pred_region
      _
    $region5: #{tpu_custom_call.1} parent=1 // pred_fallthru
      _
    // Predicated region
    $region6: #{tpu_custom_call.1} parent=1 // pred_check
      _
    $region7: #{tpu_custom_call.1} parent=1 // pred_check_branch
      %26 = sbr.rel (0) target = $region9
    $region8: #{tpu_custom_call.1} parent=1 // pred_region
      _
    $region9: #{tpu_custom_call.1} parent=1 // pred_fallthru
      _
    // Predicated region
    $region10: #{tpu_custom_call.1} parent=1 // pred_check
      _
    $region11: #{tpu_custom_call.1} parent=1 // pred_check_branch
      %28 = sbr.rel (0) target = $region13
    $region12: #{tpu_custom_call.1} parent=1 // pred_region
      %s30 = ssub.s32 64, 64
      %31 = vsyncadd [#allocation3], %s30
      %s33 = sshll.u32 [#allocation2], 4
      %s34 = int_to_ptr.vmem [resolvable:$true] %s33
      %36 = dma.hbm_to_vmem [thread:$0]  %s2, 64, %s34, [#allocation3]
    $region13: #{tpu_custom_call.1} parent=1 // pred_fallthru
      _
    // Predicated region
    $region14: #{tpu_custom_call.1} parent=1 // pred_check
      _
    $region15: #{tpu_custom_call.1} parent=1 // pred_check_branch
      %38 = sbr.rel (0) target = $region17
    $region16: #{tpu_custom_call.1} parent=1 // pred_region
      %s40 = ssub.s32 192, 192
      %41 = vsyncadd [#allocation6], %s40
      %s42 = sshll.u32 [#allocation5], 4
      %s43 = int_to_ptr.vmem [resolvable:$true] %s42
      %48 = dma.hbm_to_vmem [thread:$0]  %s3, 192, %s43, [#allocation6], 64, 64, 4
    $region17: #{tpu_custom_call.1} parent=1 // pred_fallthru
      _
    // Predicated region
    $region18: #{tpu_custom_call.1} parent=1 // pred_check
      _
    $region19: #{tpu_custom_call.1} parent=1 // pred_check_branch
      %50 = sbr.rel (0) target = $region21
    $region20: #{tpu_custom_call.1} parent=1 // pred_region
      %s52 = ssub.s32 16, 16
      %53 = vsyncadd [#allocation6], %s52
      %s55 = sshll.u32 [#allocation7], 4
      %s56 = int_to_ptr.vmem [resolvable:$true] %s55
      %58 = dma.hbm_to_vmem [thread:$0]  %s4, 16, %s56, [#allocation6]
    $region21: #{tpu_custom_call.1} parent=1 // pred_fallthru
      _
    // Predicated region
    $region22: #{tpu_custom_call.1} parent=1 // pred_check
      _
    $region23: #{tpu_custom_call.1} parent=1 // pred_check_branch
      %60 = sbr.rel (0) target = $region25
    $region24: #{tpu_custom_call.1} parent=1 // pred_region
      %s62 = ssub.s32 16, 16
      %63 = vsyncadd [#allocation9], %s62
      %s65 = sshll.u32 [#allocation8], 4
      %s66 = int_to_ptr.vmem [resolvable:$true] %s65
      %68 = dma.hbm_to_vmem [thread:$0]  %s5, 16, %s66, [#allocation9]
    $region25: #{tpu_custom_call.1} parent=1 // pred_fallthru
      _
    // Predicated region
    $region26: #{tpu_custom_call.1} parent=1 // pred_check
      _
    $region27: #{tpu_custom_call.1} parent=1 // pred_check_branch
      %70 = sbr.rel (0) target = $region29
    $region28: #{tpu_custom_call.1} parent=1 // pred_region
      %s72 = ssub.s32 16, 16
      %73 = vsyncadd [#allocation9], %s72
      %s75 = sshll.u32 [#allocation10], 4
      %s76 = int_to_ptr.vmem [resolvable:$true] %s75
      %78 = dma.hbm_to_vmem [thread:$0]  %s6, 16, %s76, [#allocation9]
    $region29: #{tpu_custom_call.1} parent=1 // pred_fallthru
      _
    // Predicated region
    $region30: #{tpu_custom_call.1} parent=1 // pred_check
      _
    $region31: #{tpu_custom_call.1} parent=1 // pred_check_branch
      %80 = sbr.rel (0) target = $region33
    $region32: #{tpu_custom_call.1} parent=1 // pred_region
      _
    $region33: #{tpu_custom_call.1} parent=1 // pred_fallthru
      _
    // Predicated region
    $region34: #{tpu_custom_call.1} parent=1 // pred_check
      _
    $region35: #{tpu_custom_call.1} parent=1 // pred_check_branch
      %82 = sbr.rel (0) target = $region37
    $region36: #{tpu_custom_call.1} parent=1 // pred_region
      _
    $region37: #{tpu_custom_call.1} parent=1 // pred_fallthru
      _
    // Predicated region
    $region38: #{tpu_custom_call.1} parent=1 // pred_check
      _
    $region39: #{tpu_custom_call.1} parent=1 // pred_check_branch
      %84 = sbr.rel (0) target = $region41
    $region40: #{tpu_custom_call.1} parent=1 // pred_region
      _
    $region41: #{tpu_custom_call.1} parent=1 // pred_fallthru
      _
    // Predicated region
    $region42: #{tpu_custom_call.1} parent=1 // pred_check
      _
    $region43: #{tpu_custom_call.1} parent=1 // pred_check_branch
      %86 = sbr.rel (0) target = $region45
    $region44: #{tpu_custom_call.1} parent=1 // pred_region
      _
    $region45: #{tpu_custom_call.1} parent=1 // pred_fallthru
      _
    // Predicated region
    $region46: #{tpu_custom_call.1} parent=1 // pred_check
      _
    $region47: #{tpu_custom_call.1} parent=1 // pred_check_branch
      %88 = sbr.rel (0) target = $region49
    $region48: #{tpu_custom_call.1} parent=1 // pred_region
      %89 = dma.done [#allocation3], 64
    $region49: #{tpu_custom_call.1} parent=1 // pred_fallthru
      _
    // Predicated region
    $region50: #{tpu_custom_call.1} parent=1 // pred_check
      _
    $region51: #{tpu_custom_call.1} parent=1 // pred_check_branch
      %91 = sbr.rel (0) target = $region53
    $region52: #{tpu_custom_call.1} parent=1 // pred_region
      %92 = dma.done [#allocation6], 192
    $region53: #{tpu_custom_call.1} parent=1 // pred_fallthru
      _
    // Predicated region
    $region54: #{tpu_custom_call.1} parent=1 // pred_check
      _
    $region55: #{tpu_custom_call.1} parent=1 // pred_check_branch
      %94 = sbr.rel (0) target = $region57
    $region56: #{tpu_custom_call.1} parent=1 // pred_region
      %95 = dma.done [#allocation6], 16
    $region57: #{tpu_custom_call.1} parent=1 // pred_fallthru
      _
    // Predicated region
    $region58: #{tpu_custom_call.1} parent=1 // pred_check
      _
    $region59: #{tpu_custom_call.1} parent=1 // pred_check_branch
      %97 = sbr.rel (0) target = $region61
    $region60: #{tpu_custom_call.1} parent=1 // pred_region
      %98 = dma.done [#allocation9], 16
    $region61: #{tpu_custom_call.1} parent=1 // pred_fallthru
      _
    // Predicated region
    $region62: #{tpu_custom_call.1} parent=1 // pred_check
      _
    $region63: #{tpu_custom_call.1} parent=1 // pred_check_branch
      %100 = sbr.rel (0) target = $region65
    $region64: #{tpu_custom_call.1} parent=1 // pred_region
      %101 = dma.done [#allocation9], 16
    $region65: #{tpu_custom_call.1} parent=1 // pred_fallthru
      _
    %v103 = vld [vmem:[%s0] sm:$0xff]
    %v104 = vld [vmem:[%s0 + $0x8] sm:$0xff]
    %v105 = vld [vmem:[#allocation5] sm:$0xf]
    %v106 = vld [vmem:[#allocation5 + $0x4] sm:$0xf]
    %v107 = vld [vmem:[#allocation5 + $0x8] sm:$0xf]
    %v108 = vpack.c.bf16 %v104, %v103
    %v109 = vld [vmem:[#allocation7] sm:$0x1]
    %v111 = vlaneseq
    %v112 = vshrl.u32 %v111, 7
    %v113 = vsub.s32 0, %v112
    %v114 = vrot.slane %v109, %v113
    %v119 = vunpack.c.l.b16 %v105
    %v120 = vunpack.c.l.b16 %v106
    %v121 = vunpack.c.l.b16 %v107
    %v122 = vpack.c.b16 %v120, %v119
    %v123 = vpack.c.b16 %v121, %v121
    %vm125 = vcmask 195584
    %v127 = vsel %vm125, %v108, 0
    %vm129 = vcmask 1043456
    %v131 = vsel %vm129, %v123, 0
    %133 = vmatprep.subr.bf16.mxu0 0
    %134 = vmatpush1.bf16.msra.mxu0 0
    %135 = vmatprep.subr.bf16.mxu0 0
    %136 = vmatpush1.bf16.msra.mxu0 0
    %137 = vmatprep.subr.bf16.mxu0 0
    %138 = vmatpush1.bf16.msra.mxu0 0
    %139 = vmatprep.subr.bf16.mxu0 0
    %140 = vmatpush1.bf16.msra.mxu0 0
    %141 = vmatprep.subr.bf16.mxu0 0
    %142 = vmatpush1.bf16.msra.mxu0 0
    %143 = vmatprep.subr.bf16.mxu0 0
    %144 = vmatpush1.bf16.msra.mxu0 0
    %145 = vmatprep.subr.bf16.mxu0 0
    %146 = vmatpush1.bf16.msra.mxu0 %v131
    %147 = vmatprep.subr.bf16.mxu0 0
    %148 = vmatpush1.bf16.msra.mxu0 %v122
    %149 = vmatprep.subr.bf16.mxu0 0
    %150 = vmatpush2.bf16.msra.mxu0 0
    %151 = vmatprep.subr.bf16.mxu0 0
    %152 = vmatpush2.bf16.msra.mxu0 0
    %153 = vmatprep.subr.bf16.mxu0 0
    %154 = vmatpush2.bf16.msra.mxu0 0
    %155 = vmatprep.subr.bf16.mxu0 0
    %156 = vmatpush2.bf16.msra.mxu0 0
    %157 = vmatprep.subr.bf16.mxu0 0
    %158 = vmatpush2.bf16.msra.mxu0 0
    %159 = vmatprep.subr.bf16.mxu0 0
    %160 = vmatpush2.bf16.msra.mxu0 0
    %161 = vmatprep.subr.bf16.mxu0 0
    %162 = vmatpush2.bf16.msra.mxu0 0
    %163 = vmatprep.subr.bf16.mxu0 0
    %164 = vmatpush2.bf16.msra.mxu0 0
    %165 = vmatprep.mubr.bf16.mxu0 0
    %166 = vmatmul.mubr.bf16.gmra.mxu0 %v127
    %v167 = vpop.f32.mrf.mxu0
    %v168 = vadd.f32 %v114, %v167
    %v169 = vpop.f32.mrf.mxu0
    %v170 = vpop.f32.mrf.mxu0
    %v171 = vadd.f32 %v114, %v170
    %v172 = vpop.f32.mrf.mxu0
    %173 = vdwg.mxu0
    %v174 = vld [vmem:[#allocation8] sm:$0x1]
    %v175 = vld [vmem:[#allocation10] sm:$0x1]
    %vm176 = vcmask 261120
    %v177 = vsel %vm176, %v168, 0.0
    %178 = vadd.xlane.f32.xlu0 %v177
    %v179 = vpop.xlane.xlu0 %178
    %v180 = vsel %vm176, %v171, 0.0
    %181 = vadd.xlane.f32.xlu0 %v180
    %v182 = vpop.xlane.xlu0 %181
    %v183 = vrcp.pop 32.0
    %v184 = vmul.f32 %v179, %v183
    %v185 = vmul.f32 %v182, %v183
    %v186 = vsub.f32 %v168, %v184
    %v187 = vsub.f32 %v171, %v185
    %v188 = vmul.f32 %v186, %v186
    %v189 = vmul.f32 %v187, %v187
    %v190 = vsel %vm176, %v188, 0.0
    %191 = vadd.xlane.f32.xlu0 %v190
    %v192 = vpop.xlane.xlu0 %191
    %v193 = vsel %vm176, %v189, 0.0
    %194 = vadd.xlane.f32.xlu0 %v193
    %v195 = vpop.xlane.xlu0 %194
    %v196 = vmul.f32 %v192, %v183
    %v197 = vmul.f32 %v195, %v183
    %v198 = vadd.f32 %v196, 1e-05
    %v199 = vadd.f32 %v197, 1e-05
    %v200 = vrsqrt.pop %v198
    %v201 = vrsqrt.pop %v199
    %v202 = vmul.f32 %v186, %v200
    %v203 = vmul.f32 %v187, %v201
    %v205 = vlaneseq
    %v206 = vshrl.u32 %v205, 7
    %v207 = vsub.s32 0, %v206
    %v208 = vrot.slane %v174, %v207
    %v210 = vmul.f32 %v202, %v208
    %v211 = vmul.f32 %v203, %v208
    %v213 = vlaneseq
    %v214 = vshrl.u32 %v213, 7
    %v215 = vsub.s32 0, %v214
    %v216 = vrot.slane %v175, %v215
    %v218 = vadd.f32 %v210, %v216
    %v219 = vadd.f32 %v211, %v216
    %v220 = vmul.f32 %v218, 0.5
    %v221 = vmul.f32 %v219, 0.5
    %v222 = vmul.f32 %v218, 0.70710677
    %v223 = vmul.f32 %v219, 0.70710677
    %v224 = verf.f32.pop %v222
    %v225 = verf.f32.pop %v223
    %v226 = vadd.f32 %v224, 1.0
    %v227 = vadd.f32 %v225, 1.0
    %v228 = vmul.f32 %v220, %v226
    %v229 = vmul.f32 %v221, %v227
    %v230 = vld [vmem:[%s7] sm:$0xf]
    %v231 = vld [vmem:[%s7 + $0x4] sm:$0xf]
    %v232 = vld [vmem:[%s7 + $0x8] sm:$0xf]
    %v233 = vld [vmem:[%s7 + $0xc] sm:$0xf]
    %v234 = vpack.c.bf16 %v229, %v228
    %v235 = vld [vmem:[%s8] sm:$0x1]
    %v237 = vlaneseq
    %v238 = vshrl.u32 %v237, 7
    %v239 = vsub.s32 0, %v238
    %v240 = vrot.slane %v235, %v239
    %v246 = vunpack.c.l.b16 %v230
    %v247 = vunpack.c.l.b16 %v231
    %v248 = vunpack.c.l.b16 %v232
    %v249 = vunpack.c.l.b16 %v233
    %v250 = vpack.c.b16 %v247, %v246
    %v251 = vpack.c.b16 %v249, %v248
    %v255 = vsel %vm176, %v234, 0
    %257 = vmatprep.subr.bf16.mxu0 0
    %258 = vmatpush1.bf16.msra.mxu0 0
    %259 = vmatprep.subr.bf16.mxu0 0
    %260 = vmatpush1.bf16.msra.mxu0 0
    %261 = vmatprep.subr.bf16.mxu0 0
    %262 = vmatpush1.bf16.msra.mxu0 0
    %263 = vmatprep.subr.bf16.mxu0 0
    %264 = vmatpush1.bf16.msra.mxu0 0
    %265 = vmatprep.subr.bf16.mxu0 0
    %266 = vmatpush1.bf16.msra.mxu0 0
    %267 = vmatprep.subr.bf16.mxu0 0
    %268 = vmatpush1.bf16.msra.mxu0 0
    %269 = vmatprep.subr.bf16.mxu0 0
    %270 = vmatpush1.bf16.msra.mxu0 %v251
    %271 = vmatprep.subr.bf16.mxu0 0
    %272 = vmatpush1.bf16.msra.mxu0 %v250
    %273 = vmatprep.subr.bf16.mxu0 0
    %274 = vmatpush2.bf16.msra.mxu0 0
    %275 = vmatprep.subr.bf16.mxu0 0
    %276 = vmatpush2.bf16.msra.mxu0 0
    %277 = vmatprep.subr.bf16.mxu0 0
    %278 = vmatpush2.bf16.msra.mxu0 0
    %279 = vmatprep.subr.bf16.mxu0 0
    %280 = vmatpush2.bf16.msra.mxu0 0
    %281 = vmatprep.subr.bf16.mxu0 0
    %282 = vmatpush2.bf16.msra.mxu0 0
    %283 = vmatprep.subr.bf16.mxu0 0
    %284 = vmatpush2.bf16.msra.mxu0 0
    %285 = vmatprep.subr.bf16.mxu0 0
    %286 = vmatpush2.bf16.msra.mxu0 0
    %287 = vmatprep.subr.bf16.mxu0 0
    %288 = vmatpush2.bf16.msra.mxu0 0
    %289 = vmatprep.mubr.bf16.mxu0 0
    %290 = vmatmul.mubr.bf16.gmra.mxu0 %v255
    %v291 = vpop.f32.mrf.mxu0
    %v292 = vadd.f32 %v240, %v291
    %v293 = vpop.f32.mrf.mxu0
    %v294 = vpop.f32.mrf.mxu0
    %v295 = vadd.f32 %v240, %v294
    %v296 = vpop.f32.mrf.mxu0
    %297 = vdwg.mxu0
    %v298 = vld [vmem:[%s9] sm:$0x1]
    %v299 = vld [vmem:[%s10] sm:$0x1]
    %v300 = vsel %vm176, %v292, 0.0
    %301 = vadd.xlane.f32.xlu0 %v300
    %v302 = vpop.xlane.xlu0 %301
    %v303 = vsel %vm176, %v295, 0.0
    %304 = vadd.xlane.f32.xlu0 %v303
    %v305 = vpop.xlane.xlu0 %304
    %v306 = vmul.f32 %v302, %v183
    %v307 = vmul.f32 %v305, %v183
    %v308 = vsub.f32 %v292, %v306
    %v309 = vsub.f32 %v295, %v307
    %v310 = vmul.f32 %v308, %v308
    %v311 = vmul.f32 %v309, %v309
    %v312 = vsel %vm176, %v310, 0.0
    %313 = vadd.xlane.f32.xlu0 %v312
    %v314 = vpop.xlane.xlu0 %313
    %v315 = vsel %vm176, %v311, 0.0
    %316 = vadd.xlane.f32.xlu0 %v315
    %v317 = vpop.xlane.xlu0 %316
    %v318 = vmul.f32 %v314, %v183
    %v319 = vmul.f32 %v317, %v183
    %v320 = vadd.f32 %v318, 1e-05
    %v321 = vadd.f32 %v319, 1e-05
    %v322 = vrsqrt.pop %v320
    %v323 = vrsqrt.pop %v321
    %v324 = vmul.f32 %v308, %v322
    %v325 = vmul.f32 %v309, %v323
    %v327 = vlaneseq
    %v328 = vshrl.u32 %v327, 7
    %v329 = vsub.s32 0, %v328
    %v330 = vrot.slane %v298, %v329
    %v332 = vmul.f32 %v324, %v330
    %v333 = vmul.f32 %v325, %v330
    %v335 = vlaneseq
    %v336 = vshrl.u32 %v335, 7
    %v337 = vsub.s32 0, %v336
    %v338 = vrot.slane %v299, %v337
    %v340 = vadd.f32 %v332, %v338
    %v341 = vadd.f32 %v333, %v338
    %v342 = vmul.f32 %v340, 0.5
    %v343 = vmul.f32 %v341, 0.5
    %v344 = vmul.f32 %v340, 0.70710677
    %v345 = vmul.f32 %v341, 0.70710677
    %v346 = verf.f32.pop %v344
    %v347 = verf.f32.pop %v345
    %v348 = vadd.f32 %v346, 1.0
    %v349 = vadd.f32 %v347, 1.0
    %v350 = vmul.f32 %v342, %v348
    %v351 = vmul.f32 %v343, %v349
    %352 = vst.msk [vmem:[#allocation11] sm:$0xff] %vm176, %v350
    %353 = vst.msk [vmem:[#allocation11 + $0x8] sm:$0xff] %vm176, %v351
    %v354 = vld [vmem:[%s1] sm:$0xff]
    %v355 = vld [vmem:[%s1 + $0x8] sm:$0xff]
    %v356 = vld [vmem:[#allocation2] sm:$0x7]
    %358 = vset.pattern.permute.xlu0 0
    %359 = vperm.xlu0 %358, %v354
    %v360 = vpop.permute.xlu0 %359
    %363 = vset.pattern.permute.xlu0 0
    %364 = vperm.xlu0 %363, %v355
    %v365 = vpop.permute.xlu0 %364
    %v367 = vlaneseq
    %v368 = vshrl.u32 %v367, 7
    %v369 = vsub.s32 0, %v368
    %v370 = vrot.slane %v356, %v369
    %v371 = vsub.f32 %v360, %v370
    %v372 = vsub.f32 %v365, %v370
    %v373 = vmul.f32 %v371, %v371
    %v374 = vmul.f32 %v372, %v372
    %375 = vset.pattern.permute.xlu0 1
    %376 = vperm.xlu0 %375, %v354
    %v377 = vpop.permute.xlu0 %376
    %379 = vset.pattern.permute.xlu0 1
    %380 = vperm.xlu0 %379, %v355
    %v381 = vpop.permute.xlu0 %380
    %v383 = vlaneseq
    %v384 = vshrl.u32 %v383, 7
    %v385 = vsub.s32 1, %v384
    %v386 = vrot.slane %v356, %v385
    %v387 = vsub.f32 %v377, %v386
    %v388 = vsub.f32 %v381, %v386
    %v389 = vmul.f32 %v387, %v387
    %v390 = vmul.f32 %v388, %v388
    %v391 = vadd.f32 %v373, %v389
    %v392 = vadd.f32 %v374, %v390
    %393 = vset.pattern.permute.xlu0 2
    %394 = vperm.xlu0 %393, %v354
    %v395 = vpop.permute.xlu0 %394
    %397 = vset.pattern.permute.xlu0 2
    %398 = vperm.xlu0 %397, %v355
    %v399 = vpop.permute.xlu0 %398
    %v401 = vlaneseq
    %v402 = vshrl.u32 %v401, 7
    %v403 = vsub.s32 2, %v402
    %v404 = vrot.slane %v356, %v403
    %v405 = vsub.f32 %v395, %v404
    %v406 = vsub.f32 %v399, %v404
    %v407 = vmul.f32 %v405, %v405
    %v408 = vmul.f32 %v406, %v406
    %v409 = vadd.f32 %v391, %v407
    %v410 = vadd.f32 %v392, %v408
    %vm411 = vcmask 130048
    %412 = vst.msk [vmem:[#allocation12] sm:$0xff] %vm411, %v409
    %413 = vst.msk [vmem:[#allocation12 + $0x8] sm:$0xff] %vm411, %v410
    // Predicated region
    $region66: #{tpu_custom_call.1} parent=1 // pred_check
      _
    $region67: #{tpu_custom_call.1} parent=1 // pred_check_branch
      %415 = sbr.rel (0) target = $region69
    $region68: #{tpu_custom_call.1} parent=1 // pred_region
      %s417 = ssub.s32 256, 256
      %418 = vsyncadd [#allocation4], %s417
      %s419 = sshll.u32 [#allocation11], 4
      %s420 = int_to_ptr.vmem [resolvable:$true] %s419
      %425 = dma.vmem_to_hbm [thread:$0]  %s420, 256, %s11, [#allocation4], 128, 128, 8
    $region69: #{tpu_custom_call.1} parent=1 // pred_fallthru
      _
    // Predicated region
    $region70: #{tpu_custom_call.1} parent=1 // pred_check
      _
    $region71: #{tpu_custom_call.1} parent=1 // pred_check_branch
      %427 = sbr.rel (0) target = $region73
    $region72: #{tpu_custom_call.1} parent=1 // pred_region
      %s429 = ssub.s32 256, 256
      %430 = vsyncadd [#allocation13], %s429
      %s431 = sshll.u32 [#allocation12], 4
      %s432 = int_to_ptr.vmem [resolvable:$true] %s431
      %437 = dma.vmem_to_hbm [thread:$0]  %s432, 256, %s12, [#allocation13], 128, 128, 8
    $region73: #{tpu_custom_call.1} parent=1 // pred_fallthru
      _
    // Predicated region
    $region74: #{tpu_custom_call.1} parent=1 // pred_check
      _
    $region75: #{tpu_custom_call.1} parent=1 // pred_check_branch
      %439 = sbr.rel (0) target = $region77
    $region76: #{tpu_custom_call.1} parent=1 // pred_region
      %440 = dma.done [#allocation4], 256
    $region77: #{tpu_custom_call.1} parent=1 // pred_fallthru
      _
    // Predicated region
    $region78: #{tpu_custom_call.1} parent=1 // pred_check
      _
    $region79: #{tpu_custom_call.1} parent=1 // pred_check_branch
      %442 = sbr.rel (0) target = $region81
    $region80: #{tpu_custom_call.1} parent=1 // pred_region
      %443 = dma.done [#allocation13], 256
    $region81: #{tpu_custom_call.1} parent=1 // pred_fallthru
      _
    %444 = vsyncpa [#allocation3], 1
    %445 = vsyncpa [#allocation6], 1
    %446 = vsyncpa [#allocation9], 1
    %447 = vsyncpa [#allocation4], 1
    %448 = vsyncpa [#allocation13], 1

</llo_original>
